<compile_context>
chip_gen: v7x
topology: tpu7x:2x2x1
jax: 0.10.0
libtpu: 0.0.40
codegen_flags: <defaults>
</compile_context>

<pallas_src>
import jax
import jax.numpy as jnp
from jax import lax
from jax.experimental import pallas as pl
from jax.experimental.pallas import tpu as pltpu


def _contrast_loss_kernel(scale_ref, labels_ref, img_rows_ref, txt_rows_ref,
                          img_full_ref, txt_full_ref, nll_ref):
    # scale_ref    : SMEM (1,)    f32   -- logit_scale
    # labels_ref   : VMEM (tm,1)  i32   -- class indices for this row tile
    # img_rows_ref : VMEM (tm,D)        -- image rows of this tile (native dtype)
    # txt_rows_ref : VMEM (tm,D)        -- text rows of this tile
    # img_full_ref : VMEM (B, D)        -- full image embedding (matmul RHS)
    # txt_full_ref : VMEM (B, D)        -- full text embedding  (matmul RHS)
    # nll_ref      : VMEM (tm,1)  f32   -- per-row NLL_img + NLL_txt (unnormalized)
    scale = scale_ref[0]

    img_r32 = img_rows_ref[...].astype(jnp.float32)
    txt_r32 = txt_rows_ref[...].astype(jnp.float32)
    img_f32 = img_full_ref[...].astype(jnp.float32)
    txt_f32 = txt_full_ref[...].astype(jnp.float32)

    # Row-wise L2 normalization with f32 accumulation; fold logit_scale into
    # the row-tile operands (per-row broadcast instead of a (tm,B) multiply).
    inv_img_r = lax.rsqrt(jnp.sum(img_r32 * img_r32, axis=-1, keepdims=True))
    inv_txt_r = lax.rsqrt(jnp.sum(txt_r32 * txt_r32, axis=-1, keepdims=True))
    inv_img_f = lax.rsqrt(jnp.sum(img_f32 * img_f32, axis=-1, keepdims=True))
    inv_txt_f = lax.rsqrt(jnp.sum(txt_f32 * txt_f32, axis=-1, keepdims=True))

    dot_dtype = img_rows_ref.dtype  # keep MXU operands in the input dtype (e.g. bf16)
    img_rn = (img_r32 * (inv_img_r * scale)).astype(dot_dtype)   # (tm, D)
    txt_rn = (txt_r32 * (inv_txt_r * scale)).astype(dot_dtype)   # (tm, D)
    img_fn = (img_f32 * inv_img_f).astype(dot_dtype)             # (B,  D)
    txt_fn = (txt_f32 * inv_txt_f).astype(dot_dtype)             # (B,  D)

    # Two "NT" MXU matmuls (contract last dims) — no (B,B) transpose on the XLU.
    nt = (((1,), (1,)), ((), ()))
    logits_img = lax.dot_general(img_rn, txt_fn, nt,
                                 preferred_element_type=jnp.float32)  # (tm, B)
    logits_txt = lax.dot_general(txt_rn, img_fn, nt,
                                 preferred_element_type=jnp.float32)  # (tm, B)

    tm = img_rows_ref.shape[0]
    n_cls = img_full_ref.shape[0]
    labels = labels_ref[...]                                          # (tm, 1) i32
    col_ids = lax.broadcasted_iota(jnp.int32, (tm, n_cls), 1)
    onehot = (col_ids == labels).astype(jnp.float32)                  # (tm, B)

    def nll_rows(lg):
        # Numerically-stable per-row NLL without materializing log-probs.
        m = jnp.max(lg, axis=-1, keepdims=True)
        lse = jnp.log(jnp.sum(jnp.exp(lg - m), axis=-1, keepdims=True)) + m
        picked = jnp.sum(lg * onehot, axis=-1, keepdims=True)
        return lse - picked                                           # (tm, 1)

    nll_ref[...] = nll_rows(logits_img) + nll_rows(logits_txt)


def _pick_row_tile(b):
    for t in (256, 128, 64, 32, 16, 8):
        if b % t == 0:
            return t
    return b  # tiny / odd batch: single tile


def contrast_loss_pallas(image_embedding, text_embedding, labels, logit_scale):
    """n_verb == 1 forward of contrast_loss. Returns scalar f32 loss."""
    B, D = image_embedding.shape
    assert text_embedding.shape == (B, D)

    tm = _pick_row_tile(B)
    nb = B // tm

    scale_arr = jnp.asarray([logit_scale], dtype=jnp.float32)
    labels2d = labels.astype(jnp.int32).reshape(B, 1)

    per_row_nll = pl.pallas_call(
        _contrast_loss_kernel,
        out_shape=jax.ShapeDtypeStruct((B, 1), jnp.float32),
        grid=(nb,),
        in_specs=[
            pl.BlockSpec(memory_space=pltpu.MemorySpace.SMEM),   # logit_scale (1,)
            pl.BlockSpec((tm, 1), lambda i: (i, 0)),             # labels tile
            pl.BlockSpec((tm, D), lambda i: (i, 0)),             # image rows
            pl.BlockSpec((tm, D), lambda i: (i, 0)),             # text rows
            pl.BlockSpec((B, D), lambda i: (0, 0)),              # image (full, resident)
            pl.BlockSpec((B, D), lambda i: (0, 0)),              # text  (full, resident)
        ],
        out_specs=pl.BlockSpec((tm, 1), lambda i: (i, 0)),
        compiler_params=pltpu.CompilerParams(
            dimension_semantics=("parallel",),
            vmem_limit_bytes=32 * 1024 * 1024,
        ),
    )(scale_arr, labels2d,
      image_embedding, text_embedding,   # native dtype, no forced f32 upcast
      image_embedding, text_embedding)

    # mean over B for each CE term, then average of the two terms.
    return jnp.sum(per_row_nll) / (2.0 * B)


def contrast_loss_reference(image_embedding, text_embedding, labels, logit_scale):
    img = image_embedding.astype(jnp.float32)
    txt = text_embedding.astype(jnp.float32)
    img_n = img / jnp.linalg.norm(img, axis=-1, keepdims=True)
    txt_n = txt / jnp.linalg.norm(txt, axis=-1, keepdims=True)
    logits_per_image = logit_scale * img_n @ txt_n.T
    logits_per_text = logits_per_image.T

    def ce(lg, y):
        logp = jax.nn.log_softmax(lg, axis=-1)
        return -jnp.mean(logp[jnp.arange(lg.shape[0]), y])

    return (ce(logits_per_image, labels) + ce(logits_per_text, labels)) / 2.0


if __name__ == "__main__":
    # Small synthetic config consistent with the module:
    #   opt.batchsize = 8, ctx_dim = 128, opt.n_verb = 1
    B, D = 8, 128
    logit_scale = float(jnp.exp(jnp.log(jnp.asarray(1.0 / 0.07))))  # CLIP-style scale

    key = jax.random.PRNGKey(0)
    k_img, k_txt = jax.random.split(key)
    image_embedding = jax.random.normal(k_img, (B, D), dtype=jnp.float32)
    text_embedding = jax.random.normal(k_txt, (B, D), dtype=jnp.float32)
    labels = jnp.arange(B, dtype=jnp.int32)  # standard contrastive targets

    loss = contrast_loss_pallas(image_embedding, text_embedding, labels, logit_scale)
    jax.block_until_ready(loss)

    ref = contrast_loss_reference(image_embedding, text_embedding, labels, logit_scale)
    assert jnp.allclose(loss, ref, rtol=1e-5, atol=1e-5), (loss, ref)

    print("KERNEL_OK")
</pallas_src>

<mosaic_0001>
module attributes {stable_mosaic.version = 11 : i64} {
  func.func @_contrast_loss_kernel(%arg0: i32, %arg1: memref<1xf32, #tpu.memory_space<smem>>, %arg2: memref<8x1xi32, #tpu.memory_space<vmem>>, %arg3: memref<8x128xf32, #tpu.memory_space<vmem>>, %arg4: memref<8x128xf32, #tpu.memory_space<vmem>>, %arg5: memref<8x128xf32, #tpu.memory_space<vmem>>, %arg6: memref<8x128xf32, #tpu.memory_space<vmem>>, %arg7: memref<8x1xf32, #tpu.memory_space<vmem>>) attributes {dimension_semantics = [#tpu.dimension_semantics<parallel>], iteration_bounds = array<i64: 1>, scalar_prefetch = 0 : i64, scratch_operands = 0 : i64, tpu.core_type = #tpu.core_type<tc>, window_params = [{transform_indices = @transform_0, window_bounds = array<i64: 1>}, {transform_indices = @transform_1, window_bounds = array<i64: 8, 1>}, {transform_indices = @transform_2, window_bounds = array<i64: 8, 128>}, {transform_indices = @transform_3, window_bounds = array<i64: 8, 128>}, {pipeline_mode = #tpu.pipeline_mode<synchronous>, transform_indices = @transform_4, window_bounds = array<i64: 8, 128>}, {pipeline_mode = #tpu.pipeline_mode<synchronous>, transform_indices = @transform_5, window_bounds = array<i64: 8, 128>}, {transform_indices = @transform_6, window_bounds = array<i64: 8, 1>}]} {
    %c0 = arith.constant 0 : index
    %0 = memref.load %arg1[%c0] : memref<1xf32, #tpu.memory_space<smem>>
    %c0_0 = arith.constant 0 : index
    %c0_1 = arith.constant 0 : index
    %1 = vector.load %arg3[%c0_0, %c0_1] : memref<8x128xf32, #tpu.memory_space<vmem>>, vector<8x128xf32>
    %c0_2 = arith.constant 0 : index
    %c0_3 = arith.constant 0 : index
    %2 = vector.load %arg4[%c0_2, %c0_3] : memref<8x128xf32, #tpu.memory_space<vmem>>, vector<8x128xf32>
    %c0_4 = arith.constant 0 : index
    %c0_5 = arith.constant 0 : index
    %3 = vector.load %arg5[%c0_4, %c0_5] : memref<8x128xf32, #tpu.memory_space<vmem>>, vector<8x128xf32>
    %c0_6 = arith.constant 0 : index
    %c0_7 = arith.constant 0 : index
    %4 = vector.load %arg6[%c0_6, %c0_7] : memref<8x128xf32, #tpu.memory_space<vmem>>, vector<8x128xf32>
    %5 = arith.mulf %1, %1 : vector<8x128xf32>
    %cst = arith.constant dense<0.000000e+00> : vector<8xf32>
    %6 = vector.multi_reduction <add>, %5, %cst [1] : vector<8x128xf32> to vector<8xf32>
    %7 = vector.shape_cast %6 : vector<8xf32> to vector<8x1xf32>
    %8 = math.rsqrt %7 : vector<8x1xf32>
    %9 = arith.mulf %2, %2 : vector<8x128xf32>
    %cst_8 = arith.constant dense<0.000000e+00> : vector<8xf32>
    %10 = vector.multi_reduction <add>, %9, %cst_8 [1] : vector<8x128xf32> to vector<8xf32>
    %11 = vector.shape_cast %10 : vector<8xf32> to vector<8x1xf32>
    %12 = math.rsqrt %11 : vector<8x1xf32>
    %13 = arith.mulf %3, %3 : vector<8x128xf32>
    %cst_9 = arith.constant dense<0.000000e+00> : vector<8xf32>
    %14 = vector.multi_reduction <add>, %13, %cst_9 [1] : vector<8x128xf32> to vector<8xf32>
    %15 = vector.shape_cast %14 : vector<8xf32> to vector<8x1xf32>
    %16 = math.rsqrt %15 : vector<8x1xf32>
    %17 = arith.mulf %4, %4 : vector<8x128xf32>
    %cst_10 = arith.constant dense<0.000000e+00> : vector<8xf32>
    %18 = vector.multi_reduction <add>, %17, %cst_10 [1] : vector<8x128xf32> to vector<8xf32>
    %19 = vector.shape_cast %18 : vector<8xf32> to vector<8x1xf32>
    %20 = math.rsqrt %19 : vector<8x1xf32>
    %21 = vector.broadcast %0 : f32 to vector<8x1xf32>
    %22 = arith.mulf %8, %21 : vector<8x1xf32>
    %23 = vector.broadcast %22 : vector<8x1xf32> to vector<8x128xf32>
    %24 = arith.mulf %1, %23 : vector<8x128xf32>
    %25 = vector.broadcast %0 : f32 to vector<8x1xf32>
    %26 = arith.mulf %12, %25 : vector<8x1xf32>
    %27 = vector.broadcast %26 : vector<8x1xf32> to vector<8x128xf32>
    %28 = arith.mulf %2, %27 : vector<8x128xf32>
    %29 = vector.broadcast %16 : vector<8x1xf32> to vector<8x128xf32>
    %30 = arith.mulf %3, %29 : vector<8x128xf32>
    %31 = vector.broadcast %20 : vector<8x1xf32> to vector<8x128xf32>
    %32 = arith.mulf %4, %31 : vector<8x128xf32>
    %cst_11 = arith.constant dense<0.000000e+00> : vector<8x8xf32>
    %33 = tpu.matmul %24, %32, %cst_11 {dimension_numbers = #tpu.dot_dimension_numbers<[1], [1], [0], [0], [0, 0, 1, 0], [], []>} : vector<8x128xf32>, vector<8x128xf32>, vector<8x8xf32> -> vector<8x8xf32>
    %cst_12 = arith.constant dense<0.000000e+00> : vector<8x8xf32>
    %34 = tpu.matmul %28, %30, %cst_12 {dimension_numbers = #tpu.dot_dimension_numbers<[1], [1], [0], [0], [0, 0, 1, 0], [], []>} : vector<8x128xf32>, vector<8x128xf32>, vector<8x8xf32> -> vector<8x8xf32>
    %c0_13 = arith.constant 0 : index
    %c0_14 = arith.constant 0 : index
    %35 = vector.load %arg2[%c0_13, %c0_14] : memref<8x1xi32, #tpu.memory_space<vmem>>, vector<8x1xi32>
    %36 = tpu.iota {dimensions = array<i32: 1>} : vector<8x8xi32>
    %37 = vector.broadcast %35 : vector<8x1xi32> to vector<8x8xi32>
    %38 = arith.cmpi eq, %36, %37 : vector<8x8xi32>
    %39 = arith.extui %38 : vector<8x8xi1> to vector<8x8xi32>
    %40 = arith.sitofp %39 : vector<8x8xi32> to vector<8x8xf32>
    %cst_15 = arith.constant dense<0xFF800000> : vector<8xf32>
    %41 = vector.multi_reduction <maximumf>, %33, %cst_15 [1] : vector<8x8xf32> to vector<8xf32>
    %42 = vector.shape_cast %41 : vector<8xf32> to vector<8x1xf32>
    %43 = vector.broadcast %42 : vector<8x1xf32> to vector<8x8xf32>
    %44 = arith.subf %33, %43 : vector<8x8xf32>
    %45 = math.exp %44 : vector<8x8xf32>
    %cst_16 = arith.constant dense<0.000000e+00> : vector<8xf32>
    %46 = vector.multi_reduction <add>, %45, %cst_16 [1] : vector<8x8xf32> to vector<8xf32>
    %47 = vector.shape_cast %46 : vector<8xf32> to vector<8x1xf32>
    %48 = math.log %47 : vector<8x1xf32>
    %49 = arith.addf %48, %42 : vector<8x1xf32>
    %50 = arith.mulf %33, %40 : vector<8x8xf32>
    %cst_17 = arith.constant dense<0.000000e+00> : vector<8xf32>
    %51 = vector.multi_reduction <add>, %50, %cst_17 [1] : vector<8x8xf32> to vector<8xf32>
    %52 = vector.shape_cast %51 : vector<8xf32> to vector<8x1xf32>
    %53 = arith.subf %49, %52 : vector<8x1xf32>
    %cst_18 = arith.constant dense<0xFF800000> : vector<8xf32>
    %54 = vector.multi_reduction <maximumf>, %34, %cst_18 [1] : vector<8x8xf32> to vector<8xf32>
    %55 = vector.shape_cast %54 : vector<8xf32> to vector<8x1xf32>
    %56 = vector.broadcast %55 : vector<8x1xf32> to vector<8x8xf32>
    %57 = arith.subf %34, %56 : vector<8x8xf32>
    %58 = math.exp %57 : vector<8x8xf32>
    %cst_19 = arith.constant dense<0.000000e+00> : vector<8xf32>
    %59 = vector.multi_reduction <add>, %58, %cst_19 [1] : vector<8x8xf32> to vector<8xf32>
    %60 = vector.shape_cast %59 : vector<8xf32> to vector<8x1xf32>
    %61 = math.log %60 : vector<8x1xf32>
    %62 = arith.addf %61, %55 : vector<8x1xf32>
    %63 = arith.mulf %34, %40 : vector<8x8xf32>
    %cst_20 = arith.constant dense<0.000000e+00> : vector<8xf32>
    %64 = vector.multi_reduction <add>, %63, %cst_20 [1] : vector<8x8xf32> to vector<8xf32>
    %65 = vector.shape_cast %64 : vector<8xf32> to vector<8x1xf32>
    %66 = arith.subf %62, %65 : vector<8x1xf32>
    %67 = arith.addf %53, %66 : vector<8x1xf32>
    %c0_21 = arith.constant 0 : index
    %c0_22 = arith.constant 0 : index
    %68 = vector.load %arg7[%c0_21, %c0_22] : memref<8x1xf32, #tpu.memory_space<vmem>>, vector<8x1xf32>
    tpu.vector_store %arg7[%c0_21, %c0_22], %67 {strides = array<i32>} : memref<8x1xf32, #tpu.memory_space<vmem>>, vector<8x1xf32>,
    return
  }
  func.func @transform_0(%arg0: i32) -> i32 {
    %c0_i32 = arith.constant 0 : i32
    %c0_i32_0 = arith.constant 0 : i32
    return %c0_i32 : i32
  }
  func.func @transform_1(%arg0: i32) -> (i32, i32) {
    %c0_i32 = arith.constant 0 : i32
    %c0_i32_0 = arith.constant 0 : i32
    return %arg0, %c0_i32 : i32, i32
  }
  func.func @transform_2(%arg0: i32) -> (i32, i32) {
    %c0_i32 = arith.constant 0 : i32
    %c0_i32_0 = arith.constant 0 : i32
    return %arg0, %c0_i32 : i32, i32
  }
  func.func @transform_3(%arg0: i32) -> (i32, i32) {
    %c0_i32 = arith.constant 0 : i32
    %c0_i32_0 = arith.constant 0 : i32
    return %arg0, %c0_i32 : i32, i32
  }
  func.func @transform_4(%arg0: i32) -> (i32, i32) {
    %c0_i32 = arith.constant 0 : i32
    %c0_i32_0 = arith.constant 0 : i32
    %c0_i32_1 = arith.constant 0 : i32
    return %c0_i32, %c0_i32_0 : i32, i32
  }
  func.func @transform_5(%arg0: i32) -> (i32, i32) {
    %c0_i32 = arith.constant 0 : i32
    %c0_i32_0 = arith.constant 0 : i32
    %c0_i32_1 = arith.constant 0 : i32
    return %c0_i32, %c0_i32_0 : i32, i32
  }
  func.func @transform_6(%arg0: i32) -> (i32, i32) {
    %c0_i32 = arith.constant 0 : i32
    %c0_i32_0 = arith.constant 0 : i32
    return %arg0, %c0_i32 : i32, i32
  }
}

</mosaic_0001>

<llo_original>
// kernel: tpu_custom_call.1
$region0: #{tpu_custom_call.1}
  #allocation0 [shape = 'u32[]', space=smem, size = 0x4, offset = 0x4, fixed_abs, tag = 'smem constant byte address 0x4 - core index']
  #allocation1 [shape = 'u32[144,128]{1,0:T(1,128)}', space=vmem, size = 0x12000, scoped, tag = 'internal scratch']
  #allocation2 [shape = 'f32[1]{0:T(128)S(6)}', space=smem, size = 0x200, scoped, tag = 'scoped memory for tpu_custom_call.1']
  %s0 = inlined_call_operand.<no memory space> [shape: f32[1], index: 0, kind: input, shape index: {}]
  %s1 = inlined_call_operand.vmem [shape: s32[8,1], index: 1, kind: input, shape index: {}]
  %s2 = inlined_call_operand.vmem [shape: f32[8,128], index: 2, kind: input, shape index: {}]
  %s3 = inlined_call_operand.vmem [shape: f32[8,128], index: 3, kind: input, shape index: {}]
  %s4 = inlined_call_operand.vmem [shape: f32[8,128], index: 4, kind: input, shape index: {}]
  %s5 = inlined_call_operand.hbm [shape: f32[8,128], index: 5, kind: input, shape index: {}]
  %s6 = inlined_call_operand.vmem [shape: f32[8,1], index: 6, kind: output, shape index: {}]
  %s7 = sld [smem:[#allocation0]]
  $region38: #{tpu_custom_call.1} parent=0
    _
  %s9 = ssub.s32 1, %s7
  %s10 = scalar_select 0, %s9, %s7
  %11 = sst [smem:[#allocation2]] %s0
  $region1: #{tpu_custom_call.1} parent=0
    #allocation3 [shape = 'u8[4096]{0}', space=vmem, size = 0x1000, scoped, tag = 'input window, operand 5, single buffered']
    #allocation4 [shape = 's32[1]{0}', space=sflag, size = 0x4, scoped, tag = 'scoped memory for tpu_custom_call.1']
    %12 = vsyncpa [#allocation4], 0
    // Predicated region
    $region2: #{tpu_custom_call.1} parent=1 // pred_check
      _
    $region3: #{tpu_custom_call.1} parent=1 // pred_check_branch
      %14 = sbr.rel (0) target = $region5
    $region4: #{tpu_custom_call.1} parent=1 // pred_region
      _
    $region5: #{tpu_custom_call.1} parent=1 // pred_fallthru
      _
    // Predicated region
    $region6: #{tpu_custom_call.1} parent=1 // pred_check
      _
    $region7: #{tpu_custom_call.1} parent=1 // pred_check_branch
      %16 = sbr.rel (0) target = $region9
    $region8: #{tpu_custom_call.1} parent=1 // pred_region
      _
    $region9: #{tpu_custom_call.1} parent=1 // pred_fallthru
      _
    // Predicated region
    $region10: #{tpu_custom_call.1} parent=1 // pred_check
      _
    $region11: #{tpu_custom_call.1} parent=1 // pred_check_branch
      %18 = sbr.rel (0) target = $region13
    $region12: #{tpu_custom_call.1} parent=1 // pred_region
      _
    $region13: #{tpu_custom_call.1} parent=1 // pred_fallthru
      _
    // Predicated region
    $region14: #{tpu_custom_call.1} parent=1 // pred_check
      _
    $region15: #{tpu_custom_call.1} parent=1 // pred_check_branch
      %20 = sbr.rel (0) target = $region17
    $region16: #{tpu_custom_call.1} parent=1 // pred_region
      _
    $region17: #{tpu_custom_call.1} parent=1 // pred_fallthru
      _
    // Predicated region
    $region18: #{tpu_custom_call.1} parent=1 // pred_check
      _
    $region19: #{tpu_custom_call.1} parent=1 // pred_check_branch
      %22 = sbr.rel (0) target = $region21
    $region20: #{tpu_custom_call.1} parent=1 // pred_region
      _
    $region21: #{tpu_custom_call.1} parent=1 // pred_fallthru
      _
    // Predicated region
    $region22: #{tpu_custom_call.1} parent=1 // pred_check
      _
    $region23: #{tpu_custom_call.1} parent=1 // pred_check_branch
      %24 = sbr.rel (0) target = $region25
    $region24: #{tpu_custom_call.1} parent=1 // pred_region
      %s26 = ssub.s32 128, 128
      %27 = vsyncadd [#allocation4], %s26
      %s29 = sshll.u32 [#allocation3], 4
      %s30 = int_to_ptr.vmem [resolvable:$true] %s29
      %32 = dma.hbm_to_vmem [thread:$0]  %s5, 128, %s30, [#allocation4]
    $region25: #{tpu_custom_call.1} parent=1 // pred_fallthru
      _
    // Predicated region
    $region26: #{tpu_custom_call.1} parent=1 // pred_check
      _
    $region27: #{tpu_custom_call.1} parent=1 // pred_check_branch
      %34 = sbr.rel (0) target = $region29
    $region28: #{tpu_custom_call.1} parent=1 // pred_region
      %35 = dma.done [#allocation4], 128
    $region29: #{tpu_custom_call.1} parent=1 // pred_fallthru
      _
    %s36 = sld [smem:[#allocation2]]
    %v37 = vld [vmem:[%s2] sm:$0xff]
    %v38 = vld [vmem:[%s3] sm:$0xff]
    %v39 = vld [vmem:[%s4] sm:$0xff]
    %v40 = vld [vmem:[#allocation3] sm:$0xff]
    %v41 = vmul.f32 %v37, %v37
    %42 = vadd.xlane.f32.xlu0 %v41
    %v43 = vpop.xlane.xlu0 %42
    %v44 = vrsqrt.pop %v43
    %v45 = vmul.f32 %v38, %v38
    %46 = vadd.xlane.f32.xlu0 %v45
    %v47 = vpop.xlane.xlu0 %46
    %v48 = vrsqrt.pop %v47
    %v49 = vmul.f32 %v39, %v39
    %50 = vadd.xlane.f32.xlu0 %v49
    %v51 = vpop.xlane.xlu0 %50
    %v52 = vrsqrt.pop %v51
    %v53 = vmul.f32 %v40, %v40
    %54 = vadd.xlane.f32.xlu0 %v53
    %v55 = vpop.xlane.xlu0 %54
    %v56 = vrsqrt.pop %v55
    %v57 = vstv %s36
    %v58 = vmul.f32 %v44, %v57
    %v59 = vmul.f32 %v37, %v58
    %v60 = vmul.f32 %v48, %v57
    %v61 = vmul.f32 %v38, %v60
    %v62 = vmul.f32 %v39, %v52
    %v63 = vmul.f32 %v40, %v56
    %64 = vmatprep.subr.mxu0 0.0
    %65 = vmatpush1.xpose.msra.mxu0 %v63
    %66 = vmatprep.subr.mxu0 0.0
    %67 = vmatpush1.xpose.msra.mxu0 0.0
    %68 = vmatprep.subr.mxu0 0.0
    %69 = vmatpush1.xpose.msra.mxu0 0.0
    %70 = vmatprep.subr.mxu0 0.0
    %71 = vmatpush1.xpose.msra.mxu0 0.0
    %72 = vmatprep.subr.mxu0 0.0
    %73 = vmatpush1.xpose.msra.mxu0 0.0
    %74 = vmatprep.subr.mxu0 0.0
    %75 = vmatpush1.xpose.msra.mxu0 0.0
    %76 = vmatprep.subr.mxu0 0.0
    %77 = vmatpush1.xpose.msra.mxu0 0.0
    %78 = vmatprep.subr.mxu0 0.0
    %79 = vmatpush1.xpose.msra.mxu0 0.0
    %80 = vmatprep.subr.mxu0 0.0
    %81 = vmatpush1.xpose.msra.mxu0 0.0
    %82 = vmatprep.subr.mxu0 0.0
    %83 = vmatpush1.xpose.msra.mxu0 0.0
    %84 = vmatprep.subr.mxu0 0.0
    %85 = vmatpush1.xpose.msra.mxu0 0.0
    %86 = vmatprep.subr.mxu0 0.0
    %87 = vmatpush1.xpose.msra.mxu0 0.0
    %88 = vmatprep.subr.mxu0 0.0
    %89 = vmatpush1.xpose.msra.mxu0 0.0
    %90 = vmatprep.subr.mxu0 0.0
    %91 = vmatpush1.xpose.msra.mxu0 0.0
    %92 = vmatprep.subr.mxu0 0.0
    %93 = vmatpush1.xpose.msra.mxu0 0.0
    %94 = vmatprep.subr.mxu0 0.0
    %95 = vmatpush1.xpose.msra.mxu0 0.0
    %96 = vmatprep.subr.mxu0 0.0
    %97 = vmatpush1.xpose.msra.mxu0 0.0
    %98 = vmatprep.subr.mxu0 0.0
    %99 = vmatpush1.xpose.msra.mxu0 0.0
    %100 = vmatprep.subr.mxu0 0.0
    %101 = vmatpush1.xpose.msra.mxu0 0.0
    %102 = vmatprep.subr.mxu0 0.0
    %103 = vmatpush1.xpose.msra.mxu0 0.0
    %104 = vmatprep.subr.mxu0 0.0
    %105 = vmatpush1.xpose.msra.mxu0 0.0
    %106 = vmatprep.subr.mxu0 0.0
    %107 = vmatpush1.xpose.msra.mxu0 0.0
    %108 = vmatprep.subr.mxu0 0.0
    %109 = vmatpush1.xpose.msra.mxu0 0.0
    %110 = vmatprep.subr.mxu0 0.0
    %111 = vmatpush1.xpose.msra.mxu0 0.0
    %112 = vmatprep.subr.mxu0 0.0
    %113 = vmatpush1.xpose.msra.mxu0 0.0
    %114 = vmatprep.subr.mxu0 0.0
    %115 = vmatpush1.xpose.msra.mxu0 0.0
    %116 = vmatprep.subr.mxu0 0.0
    %117 = vmatpush1.xpose.msra.mxu0 0.0
    %118 = vmatprep.subr.mxu0 0.0
    %119 = vmatpush1.xpose.msra.mxu0 0.0
    %120 = vmatprep.subr.mxu0 0.0
    %121 = vmatpush1.xpose.msra.mxu0 0.0
    %122 = vmatprep.subr.mxu0 0.0
    %123 = vmatpush1.xpose.msra.mxu0 0.0
    %124 = vmatprep.subr.mxu0 0.0
    %125 = vmatpush1.xpose.msra.mxu0 0.0
    %126 = vmatprep.subr.mxu0 0.0
    %127 = vmatpush1.xpose.msra.mxu0 0.0
    %128 = vmatprep.mubr.f32.mxu0 0.0
    %129 = vmatmul.mubr.f32.gmra.mrb[0].mxu0 %v59
    %v130 = vpop.f32.mrb[0].mxu0
    %v131 = vadd.f32 0.0, %v130
    %v132 = vpop.f32.mrb[0].mxu0
    %133 = vdwg.mxu0
    %134 = vmatprep.subr.mxu0 0.0
    %135 = vmatpush1.xpose.msra.mxu0 %v62
    %136 = vmatprep.subr.mxu0 0.0
    %137 = vmatpush1.xpose.msra.mxu0 0.0
    %138 = vmatprep.subr.mxu0 0.0
    %139 = vmatpush1.xpose.msra.mxu0 0.0
    %140 = vmatprep.subr.mxu0 0.0
    %141 = vmatpush1.xpose.msra.mxu0 0.0
    %142 = vmatprep.subr.mxu0 0.0
    %143 = vmatpush1.xpose.msra.mxu0 0.0
    %144 = vmatprep.subr.mxu0 0.0
    %145 = vmatpush1.xpose.msra.mxu0 0.0
    %146 = vmatprep.subr.mxu0 0.0
    %147 = vmatpush1.xpose.msra.mxu0 0.0
    %148 = vmatprep.subr.mxu0 0.0
    %149 = vmatpush1.xpose.msra.mxu0 0.0
    %150 = vmatprep.subr.mxu0 0.0
    %151 = vmatpush1.xpose.msra.mxu0 0.0
    %152 = vmatprep.subr.mxu0 0.0
    %153 = vmatpush1.xpose.msra.mxu0 0.0
    %154 = vmatprep.subr.mxu0 0.0
    %155 = vmatpush1.xpose.msra.mxu0 0.0
    %156 = vmatprep.subr.mxu0 0.0
    %157 = vmatpush1.xpose.msra.mxu0 0.0
    %158 = vmatprep.subr.mxu0 0.0
    %159 = vmatpush1.xpose.msra.mxu0 0.0
    %160 = vmatprep.subr.mxu0 0.0
    %161 = vmatpush1.xpose.msra.mxu0 0.0
    %162 = vmatprep.subr.mxu0 0.0
    %163 = vmatpush1.xpose.msra.mxu0 0.0
    %164 = vmatprep.subr.mxu0 0.0
    %165 = vmatpush1.xpose.msra.mxu0 0.0
    %166 = vmatprep.subr.mxu0 0.0
    %167 = vmatpush1.xpose.msra.mxu0 0.0
    %168 = vmatprep.subr.mxu0 0.0
    %169 = vmatpush1.xpose.msra.mxu0 0.0
    %170 = vmatprep.subr.mxu0 0.0
    %171 = vmatpush1.xpose.msra.mxu0 0.0
    %172 = vmatprep.subr.mxu0 0.0
    %173 = vmatpush1.xpose.msra.mxu0 0.0
    %174 = vmatprep.subr.mxu0 0.0
    %175 = vmatpush1.xpose.msra.mxu0 0.0
    %176 = vmatprep.subr.mxu0 0.0
    %177 = vmatpush1.xpose.msra.mxu0 0.0
    %178 = vmatprep.subr.mxu0 0.0
    %179 = vmatpush1.xpose.msra.mxu0 0.0
    %180 = vmatprep.subr.mxu0 0.0
    %181 = vmatpush1.xpose.msra.mxu0 0.0
    %182 = vmatprep.subr.mxu0 0.0
    %183 = vmatpush1.xpose.msra.mxu0 0.0
    %184 = vmatprep.subr.mxu0 0.0
    %185 = vmatpush1.xpose.msra.mxu0 0.0
    %186 = vmatprep.subr.mxu0 0.0
    %187 = vmatpush1.xpose.msra.mxu0 0.0
    %188 = vmatprep.subr.mxu0 0.0
    %189 = vmatpush1.xpose.msra.mxu0 0.0
    %190 = vmatprep.subr.mxu0 0.0
    %191 = vmatpush1.xpose.msra.mxu0 0.0
    %192 = vmatprep.subr.mxu0 0.0
    %193 = vmatpush1.xpose.msra.mxu0 0.0
    %194 = vmatprep.subr.mxu0 0.0
    %195 = vmatpush1.xpose.msra.mxu0 0.0
    %196 = vmatprep.subr.mxu0 0.0
    %197 = vmatpush1.xpose.msra.mxu0 0.0
    %198 = vmatprep.mubr.f32.mxu0 0.0
    %199 = vmatmul.mubr.f32.gmra.mrb[0].mxu0 %v61
    %v200 = vpop.f32.mrb[0].mxu0
    %v201 = vadd.f32 0.0, %v200
    %v202 = vpop.f32.mrb[0].mxu0
    %203 = vdwg.mxu0
    %v204 = vld [vmem:[%s1] sm:$0xff]
    %v205 = vlaneseq
    %v206 = vand.u32 %v205, 127
    %207 = vset.pattern.permute.xlu0 0
    %208 = vperm.xlu0 %207, %v204
    %v209 = vpop.permute.xlu0 %208
    %vm210 = vcmp.eq.s32.totalorder %v206, %v209
    %v211 = vsel %vm210, 1, 0
    %v212 = vcvt.s32.f32 %v211
    %vm213 = vcmask 64512
    %v214 = vsel %vm213, %v131, -inf
    %215 = vmax.xlane.f32.xlu0 %v214
    %v216 = vpop.xlane.xlu0 %215
    %v217 = vsub.f32 %v131, %v216
    %v218 = vmul.f32 %v217, 1.442695
    %v219 = vpow.pop %v218
    %v220 = vsel %vm213, %v219, 0.0
    %221 = vadd.xlane.f32.xlu0 %v220
    %v222 = vpop.xlane.xlu0 %221
    %v223 = vlog2.pop %v222
    %v224 = vmul.f32 %v223, 0.6931472
    %v225 = vadd.f32 %v224, %v216
    %v226 = vmul.f32 %v131, %v212
    %v227 = vsel %vm213, %v226, 0.0
    %228 = vadd.xlane.f32.xlu0 %v227
    %v229 = vpop.xlane.xlu0 %228
    %v230 = vsub.f32 %v225, %v229
    %v231 = vsel %vm213, %v201, -inf
    %232 = vmax.xlane.f32.xlu0 %v231
    %v233 = vpop.xlane.xlu0 %232
    %v234 = vsub.f32 %v201, %v233
    %v235 = vmul.f32 %v234, 1.442695
    %v236 = vpow.pop %v235
    %v237 = vsel %vm213, %v236, 0.0
    %238 = vadd.xlane.f32.xlu0 %v237
    %v239 = vpop.xlane.xlu0 %238
    %v240 = vlog2.pop %v239
    %v241 = vmul.f32 %v240, 0.6931472
    %v242 = vadd.f32 %v241, %v233
    %v243 = vmul.f32 %v201, %v212
    %v244 = vsel %vm213, %v243, 0.0
    %245 = vadd.xlane.f32.xlu0 %v244
    %v246 = vpop.xlane.xlu0 %245
    %v247 = vsub.f32 %v242, %v246
    %v248 = vadd.f32 %v230, %v247
    %vm249 = vcmask 7168
    %250 = vst.msk [vmem:[%s6] sm:$0xff] %vm249, %v248
    // Predicated region
    $region30: #{tpu_custom_call.1} parent=1 // pred_check
      _
    $region31: #{tpu_custom_call.1} parent=1 // pred_check_branch
      %252 = sbr.rel (0) target = $region33
    $region32: #{tpu_custom_call.1} parent=1 // pred_region
      _
    $region33: #{tpu_custom_call.1} parent=1 // pred_fallthru
      _
    // Predicated region
    $region34: #{tpu_custom_call.1} parent=1 // pred_check
      _
    $region35: #{tpu_custom_call.1} parent=1 // pred_check_branch
      %254 = sbr.rel (0) target = $region37
    $region36: #{tpu_custom_call.1} parent=1 // pred_region
      _
    $region37: #{tpu_custom_call.1} parent=1 // pred_fallthru
      _
    %255 = vsyncpa [#allocation4], 1

</llo_original>
